<compile_context>
chip_gen: v7x
topology: tpu7x:2x2x1
jax: 0.10.0
libtpu: 0.0.40
codegen_flags: <defaults>
</compile_context>

<pallas_src>
import math

import numpy as np
import jax
import jax.numpy as jnp
from jax import lax
from jax.experimental import pallas as pl
from jax.experimental.pallas import tpu as pltpu


# ------------------------------------------------------------------ trace-time math ---

def _inverse_affine_matrix(center, angle, translate, scale, shear):
    """Mirror of torchvision.transforms.functional._get_inverse_affine_matrix."""
    rot = math.radians(angle)
    sx = math.radians(shear[0])
    sy = math.radians(shear[1])
    cx, cy = center
    tx, ty = translate

    a = math.cos(rot - sy) / math.cos(sy)
    b = -math.cos(rot - sy) * math.tan(sx) / math.cos(sy) - math.sin(rot)
    c = math.sin(rot - sy) / math.cos(sy)
    d = -math.sin(rot - sy) * math.tan(sx) / math.cos(sy) + math.cos(rot)

    m = [d, -b, 0.0, -c, a, 0.0]
    m = [v / scale for v in m]
    m[2] += m[0] * (-cx - tx) + m[1] * (-cy - ty)
    m[5] += m[3] * (-cx - tx) + m[4] * (-cy - ty)
    m[2] += cx
    m[5] += cy
    return m


def _nearest_source_indices(theta, H, W):
    """Flat source index + validity for each output pixel (numpy, trace time)."""
    t00, t01, t02, t10, t11, t12 = (float(t) for t in theta)
    HW = H * W
    p = np.arange(HW)
    j = (p % W).astype(np.float64)   # output column
    i = (p // W).astype(np.float64)  # output row
    # torchvision _gen_affine_grid + grid_sample(align_corners=False) folded:
    #   src = theta @ [bx, by, 1] + (size - 1)/2,  bx = j - W/2 + 0.5, by = i - H/2 + 0.5
    bx = j - W * 0.5 + 0.5
    by = i - H * 0.5 + 0.5
    src_x = t00 * bx + t01 * by + t02 + (W - 1) * 0.5
    src_y = t10 * bx + t11 * by + t12 + (H - 1) * 0.5
    # round-half-to-even, matching CPU nearbyint used by grid_sample(nearest).
    ix = np.rint(src_x).astype(np.int64)
    iy = np.rint(src_y).astype(np.int64)
    valid = (ix >= 0) & (ix < W) & (iy >= 0) & (iy < H)
    flat = np.clip(iy, 0, H - 1) * W + np.clip(ix, 0, W - 1)
    return flat, valid


def _round_up(x, m):
    return ((x + m - 1) // m) * m


def _tile_bounds(flat, valid, HW, tile_p, num_tiles):
    """Per output-lane-tile [kmin, kmax) bounds over valid source rows (numpy)."""
    t = np.arange(HW) // tile_p
    kmin = np.full(num_tiles, HW, dtype=np.int64)
    kmax = np.full(num_tiles, -1, dtype=np.int64)
    np.minimum.at(kmin, t[valid], flat[valid])
    np.maximum.at(kmax, t[valid], flat[valid])
    empty = kmax < 0
    kmin = np.where(empty, 0, kmin)
    kmax = np.where(empty, 1, kmax + 1)
    return kmin, kmax


def _band_for_tiles(kmin, kmax, HW):
    """Smallest 128-multiple band B s.t. every [kmin, kmax) fits one B-aligned window."""
    max_span = int((kmax - kmin).max())
    dense = _round_up(max(HW, 1), 128)
    B = min(max(128, _round_up(max_span, 128)), dense)
    while B < dense and not np.all(kmin // B == (kmax - 1) // B):
        B += 128
    return min(B, dense)


def _plan_tiles(flat, valid, HW, NC, img_bytes, out_bytes, max_tile_lanes=None):
    """Pick (tile_p, band, per-tile K block offsets) fitting a v7x-safe VMEM budget."""
    hw_pad_out = _round_up(HW, 128)
    budget = 36 << 20  # headroom inside v7x's 64 MiB physical VMEM
    m = hw_pad_out // 128
    cands = sorted((128 * d for d in range(1, m + 1) if m % d == 0), reverse=True)
    if max_tile_lanes is not None:
        cands = [c for c in cands if c <= max_tile_lanes] or [cands[-1]]

    plan = None
    for tile_p in cands:  # largest first: fewer grid steps, bigger DMAs (v5e/v6e pref.)
        num_tiles = hw_pad_out // tile_p
        kmin, kmax = _tile_bounds(flat, valid, HW, tile_p, num_tiles)
        band = _band_for_tiles(kmin, kmax, HW)
        hw_pad_k = _round_up(HW, band)
        kblk = np.minimum(kmin // band, hw_pad_k // band - 1)
        working = (2 * NC * band * img_bytes      # image K-slice  (double-buffered)
                   + 2 * band * tile_p * 2        # bf16 one-hot   (double-buffered)
                   + 2 * NC * tile_p * out_bytes)  # output tile    (double-buffered)
        plan = (int(tile_p), int(num_tiles), int(band), kblk.astype(np.int64),
                int(hw_pad_k), int(hw_pad_out), int(working))
        if working <= budget:
            break
    return plan


def _build_banded_onehot(flat, valid, HW, tile_p, band, kblk, hw_pad_out,
                         dtype=jnp.bfloat16):
    """(band, hw_pad_out) packed selection matrix: row r, col c selects source
    kblk[c // tile_p] * band + r for output pixel c (zero column => zero fill)."""
    packed = np.zeros((band, hw_pad_out), dtype=np.float32)
    cols = np.arange(HW)
    rel = flat - kblk[cols // tile_p] * band
    ok = valid & (rel >= 0) & (rel < band)   # in-range is guaranteed by construction
    packed[rel[ok], cols[ok]] = 1.0
    return jnp.asarray(packed, dtype=dtype)


# ------------------------------------------------------------------------ the kernel ---

def _make_selection_kernel(compute_dtype):
    # HIGHEST keeps f32 image values exact through the bf16 MXU decomposition because
    # the selection operand is exactly 0/1; for small NC the extra passes are hidden
    # under the one-hot DMA.  bf16 path is exact with default precision.
    precision = lax.Precision.HIGHEST if compute_dtype == jnp.float32 else None

    def kernel(koff_ref, x_ref, sel_ref, o_ref):
        del koff_ref  # consumed by the index_maps only
        img = x_ref[...]                      # (NC, band) K-slice of the image
        if img.dtype != compute_dtype:
            img = img.astype(compute_dtype)
        sel = sel_ref[...]                    # (band, tile_p) one-hot, exact 0/1
        if sel.dtype != compute_dtype:
            # Only the small banded tile is upcast (f32 image path); hidden under DMA.
            sel = sel.astype(compute_dtype)
        out = jnp.dot(img, sel, precision=precision,
                      preferred_element_type=jnp.float32)
        o_ref[...] = out.astype(o_ref.dtype)

    return kernel


def affine_forward(img, degrees=None, translate=None, scale=None, shear=None,
                   *, max_tile_lanes=None):
    """Equivalent of Affine(degrees, translate, scale, shear).forward(img), NCHW."""
    degrees = degrees or 0.0
    translate = translate or [0, 0]
    scale = scale or 1.0
    shear = shear or [0.0, 0.0]
    if isinstance(shear, (int, float)):
        shear = [float(shear), 0.0]

    N, C, H, W = img.shape
    HW = H * W
    NC = N * C

    angle = -degrees
    # TF.affine is called with pixel translations int(round(t * size)).
    t_px = [float(int(round(translate[0] * W))), float(int(round(translate[1] * H)))]
    theta = _inverse_affine_matrix([0.0, 0.0], angle, t_px, float(scale), shear)
    flat, valid = _nearest_source_indices(theta, H, W)

    compute_dtype = jnp.bfloat16 if img.dtype == jnp.bfloat16 else jnp.float32
    img_bytes = jnp.dtype(img.dtype).itemsize
    out_bytes = img_bytes

    (tile_p, num_tiles, band, kblk,
     hw_pad_k, hw_pad_out, working) = _plan_tiles(flat, valid, HW, NC,
                                                  img_bytes, out_bytes, max_tile_lanes)

    onehot = _build_banded_onehot(flat, valid, HW, tile_p, band, kblk, hw_pad_out)
    koff = jnp.asarray(kblk, dtype=jnp.int32)          # per-tile K block offsets (SMEM)

    img2 = img.reshape(NC, HW)
    if hw_pad_k > HW:
        img2 = jnp.pad(img2, ((0, 0), (0, hw_pad_k - HW)))  # zero-pad K for aligned bands

    kernel = _make_selection_kernel(compute_dtype)

    vmem_limit = int(min(max(working + (16 << 20), 32 << 20), 50 << 20))
    cost = pl.CostEstimate(
        flops=2 * NC * band * hw_pad_out,
        bytes_accessed=(band * hw_pad_out * 2
                        + NC * hw_pad_k * img_bytes
                        + NC * hw_pad_out * out_bytes),
        transcendentals=0)

    out_flat = pl.pallas_call(
        kernel,
        out_shape=jax.ShapeDtypeStruct((NC, hw_pad_out), img.dtype),
        grid_spec=pltpu.PrefetchScalarGridSpec(
            num_scalar_prefetch=1,
            grid=(num_tiles,),
            in_specs=[
                # Image K-slice matching this tile's source-row window (data-dependent
                # block index from the scalar-prefetched offset table).
                pl.BlockSpec((NC, band), lambda p, koff_ref: (0, koff_ref[p])),
                # Banded one-hot lane tile: the dominant DMA stream, bf16 halves bytes.
                pl.BlockSpec((band, tile_p), lambda p, koff_ref: (0, p)),
            ],
            out_specs=pl.BlockSpec((NC, tile_p), lambda p, koff_ref: (0, p)),
        ),
        compiler_params=pltpu.CompilerParams(
            dimension_semantics=("parallel",),
            vmem_limit_bytes=vmem_limit),
        cost_estimate=cost,
    )(koff, img2, onehot)

    return out_flat[:, :HW].reshape(N, C, H, W)


# TODO(synk): only NEAREST interpolation (TF.affine default) is implemented; bilinear
# grid_sample would need a 4-tap weighted selection matrix (same banded structure).


# --------------------------------------------------------------------------- demo -----

def _numpy_reference(x, degrees, translate, scale, shear):
    N, C, H, W = x.shape
    HW = H * W
    if isinstance(shear, (int, float)):
        shear = [float(shear), 0.0]
    t_px = [float(int(round(translate[0] * W))), float(int(round(translate[1] * H)))]
    theta = _inverse_affine_matrix([0.0, 0.0], -degrees, t_px, float(scale), shear)
    flat, valid = _nearest_source_indices(theta, H, W)
    xnp = np.asarray(x).reshape(N * C, HW)
    return np.where(valid[None, :], xnp[:, flat], 0.0).reshape(N, C, H, W)


if __name__ == "__main__":
    key = jax.random.PRNGKey(0)
    k1, k2 = jax.random.split(key)

    # Case 1: module-shaped small input (single grid step; dense band).
    x1 = jax.random.normal(k1, (2, 4, 16, 16), dtype=jnp.float32)
    args1 = dict(degrees=15.0, translate=(0.1, 0.05), scale=1.2, shear=5.0)
    y1 = affine_forward(x1, **args1)
    jax.block_until_ready(y1)
    assert y1.shape == x1.shape and y1.dtype == x1.dtype
    np.testing.assert_allclose(np.asarray(y1), _numpy_reference(x1, **args1),
                               rtol=2e-2, atol=2e-2)

    # Case 2: exercise the banded / scalar-prefetch multi-tile path (small rotation,
    # lane tile capped so several tiles with distinct K-offsets are generated).
    x2 = jax.random.normal(k2, (1, 2, 32, 32), dtype=jnp.float32)
    args2 = dict(degrees=3.0, translate=(0.05, 0.0), scale=1.0, shear=0.0)
    y2 = affine_forward(x2, **args2, max_tile_lanes=128)
    jax.block_until_ready(y2)
    assert y2.shape == x2.shape and y2.dtype == x2.dtype
    np.testing.assert_allclose(np.asarray(y2), _numpy_reference(x2, **args2),
                               rtol=2e-2, atol=2e-2)

    print("KERNEL_OK")
</pallas_src>

<mosaic_0001>
module attributes {stable_mosaic.version = 11 : i64} {
  func.func @kernel(%arg0: i32, %arg1: memref<1xi32, #tpu.memory_space<smem>>, %arg2: memref<8x256xf32, #tpu.memory_space<vmem>>, %arg3: memref<256x256xbf16, #tpu.memory_space<vmem>>, %arg4: memref<8x256xf32, #tpu.memory_space<vmem>>) attributes {dimension_semantics = [#tpu.dimension_semantics<parallel>], iteration_bounds = array<i64: 1>, scalar_prefetch = 1 : i64, scratch_operands = 0 : i64, tpu.core_type = #tpu.core_type<tc>, window_params = [{transform_indices = @transform_0, window_bounds = array<i64: 8, 256>}, {transform_indices = @transform_1, window_bounds = array<i64: 256, 256>}, {transform_indices = @transform_2, window_bounds = array<i64: 8, 256>}]} {
    %c0 = arith.constant 0 : index
    %c0_0 = arith.constant 0 : index
    %0 = vector.load %arg2[%c0, %c0_0] : memref<8x256xf32, #tpu.memory_space<vmem>>, vector<8x256xf32>
    %c0_1 = arith.constant 0 : index
    %c0_2 = arith.constant 0 : index
    %1 = vector.load %arg3[%c0_1, %c0_2] : memref<256x256xbf16, #tpu.memory_space<vmem>>, vector<256x256xbf16>
    %2 = arith.extf %1 : vector<256x256xbf16> to vector<256x256xf32>
    %cst = arith.constant dense<0.000000e+00> : vector<8x256xf32>
    %3 = tpu.matmul %0, %2, %cst {dimension_numbers = #tpu.dot_dimension_numbers<[1], [0], [0], [1], [0, 0, 1, 1], [], []>, precision = #tpu.contract_precision<fp32>} : vector<8x256xf32>, vector<256x256xf32>, vector<8x256xf32> -> vector<8x256xf32>
    %c0_3 = arith.constant 0 : index
    %c0_4 = arith.constant 0 : index
    %4 = vector.load %arg4[%c0_3, %c0_4] : memref<8x256xf32, #tpu.memory_space<vmem>>, vector<8x256xf32>
    tpu.vector_store %arg4[%c0_3, %c0_4], %3 {strides = array<i32>} : memref<8x256xf32, #tpu.memory_space<vmem>>, vector<8x256xf32>,
    return
  }
  func.func @transform_0(%arg0: i32, %arg1: memref<1xi32, #tpu.memory_space<smem>>) -> (i32, i32) {
    %0 = arith.index_cast %arg0 : i32 to index
    %1 = memref.load %arg1[%0] : memref<1xi32, #tpu.memory_space<smem>>
    %c0_i32 = arith.constant 0 : i32
    %c0_i32_0 = arith.constant 0 : i32
    return %c0_i32, %1 : i32, i32
  }
  func.func @transform_1(%arg0: i32, %arg1: memref<1xi32, #tpu.memory_space<smem>>) -> (i32, i32) {
    %c0_i32 = arith.constant 0 : i32
    %c0_i32_0 = arith.constant 0 : i32
    return %c0_i32, %arg0 : i32, i32
  }
  func.func @transform_2(%arg0: i32, %arg1: memref<1xi32, #tpu.memory_space<smem>>) -> (i32, i32) {
    %c0_i32 = arith.constant 0 : i32
    %c0_i32_0 = arith.constant 0 : i32
    return %c0_i32, %arg0 : i32, i32
  }
}

</mosaic_0001>

<llo_original>
// kernel: tpu_custom_call.1
$region0: #{tpu_custom_call.1}
  #allocation0 [shape = 'u32[]', space=smem, size = 0x4, offset = 0x4, fixed_abs, tag = 'smem constant byte address 0x4 - core index']
  #allocation1 [shape = 'u32[144,128]{1,0:T(1,128)}', space=vmem, size = 0x12000, scoped, tag = 'internal scratch']
  #allocation2 [shape = 's32[1]{0}', space=sflag, size = 0x4, scoped, tag = 'scoped memory for tpu_custom_call.1']
  #allocation3 [shape = 's32[1]{0:T(128)S(6)}', space=smem, size = 0x200, scoped, tag = 'prefetched SMEM operand 0']
  %s0 = inlined_call_operand.<no memory space> [shape: s32[1], index: 0, kind: input, shape index: {}]
  %s1 = inlined_call_operand.hbm [shape: f32[8,256], index: 1, kind: input, shape index: {}]
  %s2 = inlined_call_operand.hbm [shape: bf16[256,256], index: 2, kind: input, shape index: {}]
  %s3 = inlined_call_operand.hbm [shape: f32[8,256], index: 3, kind: output, shape index: {}]
  %s4 = sld [smem:[#allocation0]]
  $region26: #{tpu_custom_call.1} parent=0
    _
  %s6 = ssub.s32 1, %s4
  %s7 = scalar_select 0, %s6, %s4
  %8 = sst [smem:[#allocation3]] %s0
  $region1: #{tpu_custom_call.1} parent=0
    #allocation4 [shape = 'u8[8192]{0}', space=vmem, size = 0x2000, scoped, tag = 'input window, operand 1, single buffered']
    #allocation5 [shape = 's32[1]{0}', space=sflag, size = 0x4, scoped, tag = 'scoped memory for tpu_custom_call.1']
    #allocation6 [shape = 's32[1]{0}', space=sflag, size = 0x4, scoped, tag = 'scoped memory for tpu_custom_call.1']
    #allocation7 [shape = 'u8[131072]{0}', space=vmem, size = 0x20000, scoped, tag = 'input window, operand 2, single buffered']
    #allocation8 [shape = 's32[1]{0}', space=sflag, size = 0x4, scoped, tag = 'scoped memory for tpu_custom_call.1']
    #allocation9 [shape = 'u8[8192]{0}', space=vmem, size = 0x2000, scoped, tag = 'output window, operand 0, single buffered']
    %9 = vsyncpa [#allocation5], 0
    %10 = vsyncpa [#allocation8], 0
    %11 = vsyncpa [#allocation6], 0
    // Predicated region
    $region2: #{tpu_custom_call.1} parent=1 // pred_check
      _
    $region3: #{tpu_custom_call.1} parent=1 // pred_check_branch
      %13 = sbr.rel (0) target = $region5
    $region4: #{tpu_custom_call.1} parent=1 // pred_region
      %s14 = sld [smem:[#allocation3]]
      %s15 = smul.u32 2, %s14
      %s17 = ssub.s32 256, 256
      %18 = vsyncadd [#allocation5], %s17
      %s19 = smul.addr %s15, 128
      %s20 = scalar_lea.hbm %s1, %s19
      %s22 = sshll.u32 [#allocation4], 4
      %s23 = int_to_ptr.vmem [resolvable:$true] %s22
      %25 = dma.hbm_to_vmem [thread:$0]  %s20, 256, %s23, [#allocation5]
    $region5: #{tpu_custom_call.1} parent=1 // pred_fallthru
      _
    // Predicated region
    $region6: #{tpu_custom_call.1} parent=1 // pred_check
      _
    $region7: #{tpu_custom_call.1} parent=1 // pred_check_branch
      %27 = sbr.rel (0) target = $region9
    $region8: #{tpu_custom_call.1} parent=1 // pred_region
      %s29 = ssub.s32 4096, 4096
      %30 = vsyncadd [#allocation8], %s29
      %s31 = sshll.u32 [#allocation7], 4
      %s32 = int_to_ptr.vmem [resolvable:$true] %s31
      %37 = dma.hbm_to_vmem [thread:$0]  %s2, 4096, %s32, [#allocation8], 128, 128, 8
    $region9: #{tpu_custom_call.1} parent=1 // pred_fallthru
      _
    // Predicated region
    $region10: #{tpu_custom_call.1} parent=1 // pred_check
      _
    $region11: #{tpu_custom_call.1} parent=1 // pred_check_branch
      %39 = sbr.rel (0) target = $region13
    $region12: #{tpu_custom_call.1} parent=1 // pred_region
      %40 = dma.done [#allocation5], 256
    $region13: #{tpu_custom_call.1} parent=1 // pred_fallthru
      _
    // Predicated region
    $region14: #{tpu_custom_call.1} parent=1 // pred_check
      _
    $region15: #{tpu_custom_call.1} parent=1 // pred_check_branch
      %42 = sbr.rel (0) target = $region17
    $region16: #{tpu_custom_call.1} parent=1 // pred_region
      %43 = dma.done [#allocation8], 4096
    $region17: #{tpu_custom_call.1} parent=1 // pred_fallthru
      _
    %s44 = sld [smem:[#allocation3]]
    %s45 = smul.u32 2, %s44
    %v46 = vld [vmem:[#allocation4] sm:$0xff]
    %v47 = vld [vmem:[#allocation4 + $0x8] sm:$0xff]
    %v48 = vld [vmem:[#allocation7] sm:$0xff]
    %v49 = vld [vmem:[#allocation7 + $0x8] sm:$0xff]
    %v50 = vld [vmem:[#allocation7 + $0x10] sm:$0xff]
    %v51 = vld [vmem:[#allocation7 + $0x18] sm:$0xff]
    %v52 = vld [vmem:[#allocation7 + $0x20] sm:$0xff]
    %v53 = vld [vmem:[#allocation7 + $0x28] sm:$0xff]
    %v54 = vld [vmem:[#allocation7 + $0x30] sm:$0xff]
    %v55 = vld [vmem:[#allocation7 + $0x38] sm:$0xff]
    %v56 = vld [vmem:[#allocation7 + $0x40] sm:$0xff]
    %v57 = vld [vmem:[#allocation7 + $0x48] sm:$0xff]
    %v58 = vld [vmem:[#allocation7 + $0x50] sm:$0xff]
    %v59 = vld [vmem:[#allocation7 + $0x58] sm:$0xff]
    %v60 = vld [vmem:[#allocation7 + $0x60] sm:$0xff]
    %v61 = vld [vmem:[#allocation7 + $0x68] sm:$0xff]
    %v62 = vld [vmem:[#allocation7 + $0x70] sm:$0xff]
    %v63 = vld [vmem:[#allocation7 + $0x78] sm:$0xff]
    %v64 = vld [vmem:[#allocation7 + $0x80] sm:$0xff]
    %v65 = vld [vmem:[#allocation7 + $0x88] sm:$0xff]
    %v66 = vld [vmem:[#allocation7 + $0x90] sm:$0xff]
    %v67 = vld [vmem:[#allocation7 + $0x98] sm:$0xff]
    %v68 = vld [vmem:[#allocation7 + $0xa0] sm:$0xff]
    %v69 = vld [vmem:[#allocation7 + $0xa8] sm:$0xff]
    %v70 = vld [vmem:[#allocation7 + $0xb0] sm:$0xff]
    %v71 = vld [vmem:[#allocation7 + $0xb8] sm:$0xff]
    %v72 = vld [vmem:[#allocation7 + $0xc0] sm:$0xff]
    %v73 = vld [vmem:[#allocation7 + $0xc8] sm:$0xff]
    %v74 = vld [vmem:[#allocation7 + $0xd0] sm:$0xff]
    %v75 = vld [vmem:[#allocation7 + $0xd8] sm:$0xff]
    %v76 = vld [vmem:[#allocation7 + $0xe0] sm:$0xff]
    %v77 = vld [vmem:[#allocation7 + $0xe8] sm:$0xff]
    %v78 = vld [vmem:[#allocation7 + $0xf0] sm:$0xff]
    %v79 = vld [vmem:[#allocation7 + $0xf8] sm:$0xff]
    %v80 = vunpack.c.l.bf16 %v48
    %v81 = vunpack.c.h.bf16 %v48
    %v82 = vunpack.c.l.bf16 %v49
    %v83 = vunpack.c.h.bf16 %v49
    %v84 = vunpack.c.l.bf16 %v50
    %v85 = vunpack.c.h.bf16 %v50
    %v86 = vunpack.c.l.bf16 %v51
    %v87 = vunpack.c.h.bf16 %v51
    %v88 = vunpack.c.l.bf16 %v52
    %v89 = vunpack.c.h.bf16 %v52
    %v90 = vunpack.c.l.bf16 %v53
    %v91 = vunpack.c.h.bf16 %v53
    %v92 = vunpack.c.l.bf16 %v54
    %v93 = vunpack.c.h.bf16 %v54
    %v94 = vunpack.c.l.bf16 %v55
    %v95 = vunpack.c.h.bf16 %v55
    %v96 = vunpack.c.l.bf16 %v56
    %v97 = vunpack.c.h.bf16 %v56
    %v98 = vunpack.c.l.bf16 %v57
    %v99 = vunpack.c.h.bf16 %v57
    %v100 = vunpack.c.l.bf16 %v58
    %v101 = vunpack.c.h.bf16 %v58
    %v102 = vunpack.c.l.bf16 %v59
    %v103 = vunpack.c.h.bf16 %v59
    %v104 = vunpack.c.l.bf16 %v60
    %v105 = vunpack.c.h.bf16 %v60
    %v106 = vunpack.c.l.bf16 %v61
    %v107 = vunpack.c.h.bf16 %v61
    %v108 = vunpack.c.l.bf16 %v62
    %v109 = vunpack.c.h.bf16 %v62
    %v110 = vunpack.c.l.bf16 %v63
    %v111 = vunpack.c.h.bf16 %v63
    %v112 = vunpack.c.l.bf16 %v64
    %v113 = vunpack.c.h.bf16 %v64
    %v114 = vunpack.c.l.bf16 %v65
    %v115 = vunpack.c.h.bf16 %v65
    %v116 = vunpack.c.l.bf16 %v66
    %v117 = vunpack.c.h.bf16 %v66
    %v118 = vunpack.c.l.bf16 %v67
    %v119 = vunpack.c.h.bf16 %v67
    %v120 = vunpack.c.l.bf16 %v68
    %v121 = vunpack.c.h.bf16 %v68
    %v122 = vunpack.c.l.bf16 %v69
    %v123 = vunpack.c.h.bf16 %v69
    %v124 = vunpack.c.l.bf16 %v70
    %v125 = vunpack.c.h.bf16 %v70
    %v126 = vunpack.c.l.bf16 %v71
    %v127 = vunpack.c.h.bf16 %v71
    %v128 = vunpack.c.l.bf16 %v72
    %v129 = vunpack.c.h.bf16 %v72
    %v130 = vunpack.c.l.bf16 %v73
    %v131 = vunpack.c.h.bf16 %v73
    %v132 = vunpack.c.l.bf16 %v74
    %v133 = vunpack.c.h.bf16 %v74
    %v134 = vunpack.c.l.bf16 %v75
    %v135 = vunpack.c.h.bf16 %v75
    %v136 = vunpack.c.l.bf16 %v76
    %v137 = vunpack.c.h.bf16 %v76
    %v138 = vunpack.c.l.bf16 %v77
    %v139 = vunpack.c.h.bf16 %v77
    %v140 = vunpack.c.l.bf16 %v78
    %v141 = vunpack.c.h.bf16 %v78
    %v142 = vunpack.c.l.bf16 %v79
    %v143 = vunpack.c.h.bf16 %v79
    %144 = vmatprep.subr.mxu0 %v81
    %145 = vmatpush1.msra.mxu0 %v80
    %146 = vmatprep.subr.mxu0 %v83
    %147 = vmatpush1.msra.mxu0 %v82
    %148 = vmatprep.subr.mxu0 %v85
    %149 = vmatpush1.msra.mxu0 %v84
    %150 = vmatprep.subr.mxu0 %v87
    %151 = vmatpush1.msra.mxu0 %v86
    %152 = vmatprep.subr.mxu0 %v89
    %153 = vmatpush1.msra.mxu0 %v88
    %154 = vmatprep.subr.mxu0 %v91
    %155 = vmatpush1.msra.mxu0 %v90
    %156 = vmatprep.subr.mxu0 %v93
    %157 = vmatpush1.msra.mxu0 %v92
    %158 = vmatprep.subr.mxu0 %v95
    %159 = vmatpush1.msra.mxu0 %v94
    %160 = vmatprep.subr.mxu0 %v97
    %161 = vmatpush1.msra.mxu0 %v96
    %162 = vmatprep.subr.mxu0 %v99
    %163 = vmatpush1.msra.mxu0 %v98
    %164 = vmatprep.subr.mxu0 %v101
    %165 = vmatpush1.msra.mxu0 %v100
    %166 = vmatprep.subr.mxu0 %v103
    %167 = vmatpush1.msra.mxu0 %v102
    %168 = vmatprep.subr.mxu0 %v105
    %169 = vmatpush1.msra.mxu0 %v104
    %170 = vmatprep.subr.mxu0 %v107
    %171 = vmatpush1.msra.mxu0 %v106
    %172 = vmatprep.subr.mxu0 %v109
    %173 = vmatpush1.msra.mxu0 %v108
    %174 = vmatprep.subr.mxu0 %v111
    %175 = vmatpush1.msra.mxu0 %v110
    %176 = vmatprep.subr.mxu0 %v113
    %177 = vmatpush1.msra.mxu0 %v112
    %178 = vmatprep.subr.mxu0 %v115
    %179 = vmatpush1.msra.mxu0 %v114
    %180 = vmatprep.subr.mxu0 %v117
    %181 = vmatpush1.msra.mxu0 %v116
    %182 = vmatprep.subr.mxu0 %v119
    %183 = vmatpush1.msra.mxu0 %v118
    %184 = vmatprep.subr.mxu0 %v121
    %185 = vmatpush1.msra.mxu0 %v120
    %186 = vmatprep.subr.mxu0 %v123
    %187 = vmatpush1.msra.mxu0 %v122
    %188 = vmatprep.subr.mxu0 %v125
    %189 = vmatpush1.msra.mxu0 %v124
    %190 = vmatprep.subr.mxu0 %v127
    %191 = vmatpush1.msra.mxu0 %v126
    %192 = vmatprep.subr.mxu0 %v129
    %193 = vmatpush1.msra.mxu0 %v128
    %194 = vmatprep.subr.mxu0 %v131
    %195 = vmatpush1.msra.mxu0 %v130
    %196 = vmatprep.subr.mxu0 %v133
    %197 = vmatpush1.msra.mxu0 %v132
    %198 = vmatprep.subr.mxu0 %v135
    %199 = vmatpush1.msra.mxu0 %v134
    %200 = vmatprep.subr.mxu0 %v137
    %201 = vmatpush1.msra.mxu0 %v136
    %202 = vmatprep.subr.mxu0 %v139
    %203 = vmatpush1.msra.mxu0 %v138
    %204 = vmatprep.subr.mxu0 %v141
    %205 = vmatpush1.msra.mxu0 %v140
    %206 = vmatprep.subr.mxu0 %v143
    %207 = vmatpush1.msra.mxu0 %v142
    %v208 = vand.u32 %v47, 4294901760
    %v209 = vsub.f32 %v47, %v208
    %v210 = vand.u32 %v209, 4294901760
    %v211 = vsub.f32 %v209, %v210
    %v212 = vand.u32 %v211, 4294901760
    %213 = vmatprep.mubr.f32.mxu0 %v212
    %v214 = vand.u32 %v46, 4294901760
    %v215 = vsub.f32 %v46, %v214
    %v216 = vand.u32 %v215, 4294901760
    %v217 = vsub.f32 %v215, %v216
    %v218 = vand.u32 %v217, 4294901760
    %219 = vmatmul.mubr.f32.gmra.mrb[0].mxu0 %v218
    %v220 = vpop.f32.mrb[0].mxu0
    %v221 = vadd.f32 0.0, %v220
    %v222 = vpop.f32.mrb[0].mxu0
    %v223 = vadd.f32 0.0, %v222
    %224 = vdwg.mxu0
    %v225 = vsub.f32 %v81, %v81
    %v226 = vand.u32 %v225, 4294901760
    %v227 = vsub.f32 %v225, %v226
    %v228 = vand.u32 %v227, 4294901760
    %229 = vmatprep.subr.mxu0 %v228
    %v230 = vsub.f32 %v80, %v80
    %v231 = vand.u32 %v230, 4294901760
    %v232 = vsub.f32 %v230, %v231
    %v233 = vand.u32 %v232, 4294901760
    %234 = vmatpush1.msra.mxu0 %v233
    %v235 = vsub.f32 %v83, %v83
    %v236 = vand.u32 %v235, 4294901760
    %v237 = vsub.f32 %v235, %v236
    %v238 = vand.u32 %v237, 4294901760
    %239 = vmatprep.subr.mxu0 %v238
    %v240 = vsub.f32 %v82, %v82
    %v241 = vand.u32 %v240, 4294901760
    %v242 = vsub.f32 %v240, %v241
    %v243 = vand.u32 %v242, 4294901760
    %244 = vmatpush1.msra.mxu0 %v243
    %v245 = vsub.f32 %v85, %v85
    %v246 = vand.u32 %v245, 4294901760
    %v247 = vsub.f32 %v245, %v246
    %v248 = vand.u32 %v247, 4294901760
    %249 = vmatprep.subr.mxu0 %v248
    %v250 = vsub.f32 %v84, %v84
    %v251 = vand.u32 %v250, 4294901760
    %v252 = vsub.f32 %v250, %v251
    %v253 = vand.u32 %v252, 4294901760
    %254 = vmatpush1.msra.mxu0 %v253
    %v255 = vsub.f32 %v87, %v87
    %v256 = vand.u32 %v255, 4294901760
    %v257 = vsub.f32 %v255, %v256
    %v258 = vand.u32 %v257, 4294901760
    %259 = vmatprep.subr.mxu0 %v258
    %v260 = vsub.f32 %v86, %v86
    %v261 = vand.u32 %v260, 4294901760
    %v262 = vsub.f32 %v260, %v261
    %v263 = vand.u32 %v262, 4294901760
    %264 = vmatpush1.msra.mxu0 %v263
    %v265 = vsub.f32 %v89, %v89
    %v266 = vand.u32 %v265, 4294901760
    %v267 = vsub.f32 %v265, %v266
    %v268 = vand.u32 %v267, 4294901760
    %269 = vmatprep.subr.mxu0 %v268
    %v270 = vsub.f32 %v88, %v88
    %v271 = vand.u32 %v270, 4294901760
    %v272 = vsub.f32 %v270, %v271
    %v273 = vand.u32 %v272, 4294901760
    %274 = vmatpush1.msra.mxu0 %v273
    %v275 = vsub.f32 %v91, %v91
    %v276 = vand.u32 %v275, 4294901760
    %v277 = vsub.f32 %v275, %v276
    %v278 = vand.u32 %v277, 4294901760
    %279 = vmatprep.subr.mxu0 %v278
    %v280 = vsub.f32 %v90, %v90
    %v281 = vand.u32 %v280, 4294901760
    %v282 = vsub.f32 %v280, %v281
    %v283 = vand.u32 %v282, 4294901760
    %284 = vmatpush1.msra.mxu0 %v283
    %v285 = vsub.f32 %v93, %v93
    %v286 = vand.u32 %v285, 4294901760
    %v287 = vsub.f32 %v285, %v286
    %v288 = vand.u32 %v287, 4294901760
    %289 = vmatprep.subr.mxu0 %v288
    %v290 = vsub.f32 %v92, %v92
    %v291 = vand.u32 %v290, 4294901760
    %v292 = vsub.f32 %v290, %v291
    %v293 = vand.u32 %v292, 4294901760
    %294 = vmatpush1.msra.mxu0 %v293
    %v295 = vsub.f32 %v95, %v95
    %v296 = vand.u32 %v295, 4294901760
    %v297 = vsub.f32 %v295, %v296
    %v298 = vand.u32 %v297, 4294901760
    %299 = vmatprep.subr.mxu0 %v298
    %v300 = vsub.f32 %v94, %v94
    %v301 = vand.u32 %v300, 4294901760
    %v302 = vsub.f32 %v300, %v301
    %v303 = vand.u32 %v302, 4294901760
    %304 = vmatpush1.msra.mxu0 %v303
    %v305 = vsub.f32 %v97, %v97
    %v306 = vand.u32 %v305, 4294901760
    %v307 = vsub.f32 %v305, %v306
    %v308 = vand.u32 %v307, 4294901760
    %309 = vmatprep.subr.mxu0 %v308
    %v310 = vsub.f32 %v96, %v96
    %v311 = vand.u32 %v310, 4294901760
    %v312 = vsub.f32 %v310, %v311
    %v313 = vand.u32 %v312, 4294901760
    %314 = vmatpush1.msra.mxu0 %v313
    %v315 = vsub.f32 %v99, %v99
    %v316 = vand.u32 %v315, 4294901760
    %v317 = vsub.f32 %v315, %v316
    %v318 = vand.u32 %v317, 4294901760
    %319 = vmatprep.subr.mxu0 %v318
    %v320 = vsub.f32 %v98, %v98
    %v321 = vand.u32 %v320, 4294901760
    %v322 = vsub.f32 %v320, %v321
    %v323 = vand.u32 %v322, 4294901760
    %324 = vmatpush1.msra.mxu0 %v323
    %v325 = vsub.f32 %v101, %v101
    %v326 = vand.u32 %v325, 4294901760
    %v327 = vsub.f32 %v325, %v326
    %v328 = vand.u32 %v327, 4294901760
    %329 = vmatprep.subr.mxu0 %v328
    %v330 = vsub.f32 %v100, %v100
    %v331 = vand.u32 %v330, 4294901760
    %v332 = vsub.f32 %v330, %v331
    %v333 = vand.u32 %v332, 4294901760
    %334 = vmatpush1.msra.mxu0 %v333
    %v335 = vsub.f32 %v103, %v103
    %v336 = vand.u32 %v335, 4294901760
    %v337 = vsub.f32 %v335, %v336
    %v338 = vand.u32 %v337, 4294901760
    %339 = vmatprep.subr.mxu0 %v338
    %v340 = vsub.f32 %v102, %v102
    %v341 = vand.u32 %v340, 4294901760
    %v342 = vsub.f32 %v340, %v341
    %v343 = vand.u32 %v342, 4294901760
    %344 = vmatpush1.msra.mxu0 %v343
    %v345 = vsub.f32 %v105, %v105
    %v346 = vand.u32 %v345, 4294901760
    %v347 = vsub.f32 %v345, %v346
    %v348 = vand.u32 %v347, 4294901760
    %349 = vmatprep.subr.mxu0 %v348
    %v350 = vsub.f32 %v104, %v104
    %v351 = vand.u32 %v350, 4294901760
    %v352 = vsub.f32 %v350, %v351
    %v353 = vand.u32 %v352, 4294901760
    %354 = vmatpush1.msra.mxu0 %v353
    %v355 = vsub.f32 %v107, %v107
    %v356 = vand.u32 %v355, 4294901760
    %v357 = vsub.f32 %v355, %v356
    %v358 = vand.u32 %v357, 4294901760
    %359 = vmatprep.subr.mxu0 %v358
    %v360 = vsub.f32 %v106, %v106
    %v361 = vand.u32 %v360, 4294901760
    %v362 = vsub.f32 %v360, %v361
    %v363 = vand.u32 %v362, 4294901760
    %364 = vmatpush1.msra.mxu0 %v363
    %v365 = vsub.f32 %v109, %v109
    %v366 = vand.u32 %v365, 4294901760
    %v367 = vsub.f32 %v365, %v366
    %v368 = vand.u32 %v367, 4294901760
    %369 = vmatprep.subr.mxu0 %v368
    %v370 = vsub.f32 %v108, %v108
    %v371 = vand.u32 %v370, 4294901760
    %v372 = vsub.f32 %v370, %v371
    %v373 = vand.u32 %v372, 4294901760
    %374 = vmatpush1.msra.mxu0 %v373
    %v375 = vsub.f32 %v111, %v111
    %v376 = vand.u32 %v375, 4294901760
    %v377 = vsub.f32 %v375, %v376
    %v378 = vand.u32 %v377, 4294901760
    %379 = vmatprep.subr.mxu0 %v378
    %v380 = vsub.f32 %v110, %v110
    %v381 = vand.u32 %v380, 4294901760
    %v382 = vsub.f32 %v380, %v381
    %v383 = vand.u32 %v382, 4294901760
    %384 = vmatpush1.msra.mxu0 %v383
    %v385 = vsub.f32 %v113, %v113
    %v386 = vand.u32 %v385, 4294901760
    %v387 = vsub.f32 %v385, %v386
    %v388 = vand.u32 %v387, 4294901760
    %389 = vmatprep.subr.mxu0 %v388
    %v390 = vsub.f32 %v112, %v112
    %v391 = vand.u32 %v390, 4294901760
    %v392 = vsub.f32 %v390, %v391
    %v393 = vand.u32 %v392, 4294901760
    %394 = vmatpush1.msra.mxu0 %v393
    %v395 = vsub.f32 %v115, %v115
    %v396 = vand.u32 %v395, 4294901760
    %v397 = vsub.f32 %v395, %v396
    %v398 = vand.u32 %v397, 4294901760
    %399 = vmatprep.subr.mxu0 %v398
    %v400 = vsub.f32 %v114, %v114
    %v401 = vand.u32 %v400, 4294901760
    %v402 = vsub.f32 %v400, %v401
    %v403 = vand.u32 %v402, 4294901760
    %404 = vmatpush1.msra.mxu0 %v403
    %v405 = vsub.f32 %v117, %v117
    %v406 = vand.u32 %v405, 4294901760
    %v407 = vsub.f32 %v405, %v406
    %v408 = vand.u32 %v407, 4294901760
    %409 = vmatprep.subr.mxu0 %v408
    %v410 = vsub.f32 %v116, %v116
    %v411 = vand.u32 %v410, 4294901760
    %v412 = vsub.f32 %v410, %v411
    %v413 = vand.u32 %v412, 4294901760
    %414 = vmatpush1.msra.mxu0 %v413
    %v415 = vsub.f32 %v119, %v119
    %v416 = vand.u32 %v415, 4294901760
    %v417 = vsub.f32 %v415, %v416
    %v418 = vand.u32 %v417, 4294901760
    %419 = vmatprep.subr.mxu0 %v418
    %v420 = vsub.f32 %v118, %v118
    %v421 = vand.u32 %v420, 4294901760
    %v422 = vsub.f32 %v420, %v421
    %v423 = vand.u32 %v422, 4294901760
    %424 = vmatpush1.msra.mxu0 %v423
    %v425 = vsub.f32 %v121, %v121
    %v426 = vand.u32 %v425, 4294901760
    %v427 = vsub.f32 %v425, %v426
    %v428 = vand.u32 %v427, 4294901760
    %429 = vmatprep.subr.mxu0 %v428
    %v430 = vsub.f32 %v120, %v120
    %v431 = vand.u32 %v430, 4294901760
    %v432 = vsub.f32 %v430, %v431
    %v433 = vand.u32 %v432, 4294901760
    %434 = vmatpush1.msra.mxu0 %v433
    %v435 = vsub.f32 %v123, %v123
    %v436 = vand.u32 %v435, 4294901760
    %v437 = vsub.f32 %v435, %v436
    %v438 = vand.u32 %v437, 4294901760
    %439 = vmatprep.subr.mxu0 %v438
    %v440 = vsub.f32 %v122, %v122
    %v441 = vand.u32 %v440, 4294901760
    %v442 = vsub.f32 %v440, %v441
    %v443 = vand.u32 %v442, 4294901760
    %444 = vmatpush1.msra.mxu0 %v443
    %v445 = vsub.f32 %v125, %v125
    %v446 = vand.u32 %v445, 4294901760
    %v447 = vsub.f32 %v445, %v446
    %v448 = vand.u32 %v447, 4294901760
    %449 = vmatprep.subr.mxu0 %v448
    %v450 = vsub.f32 %v124, %v124
    %v451 = vand.u32 %v450, 4294901760
    %v452 = vsub.f32 %v450, %v451
    %v453 = vand.u32 %v452, 4294901760
    %454 = vmatpush1.msra.mxu0 %v453
    %v455 = vsub.f32 %v127, %v127
    %v456 = vand.u32 %v455, 4294901760
    %v457 = vsub.f32 %v455, %v456
    %v458 = vand.u32 %v457, 4294901760
    %459 = vmatprep.subr.mxu0 %v458
    %v460 = vsub.f32 %v126, %v126
    %v461 = vand.u32 %v460, 4294901760
    %v462 = vsub.f32 %v460, %v461
    %v463 = vand.u32 %v462, 4294901760
    %464 = vmatpush1.msra.mxu0 %v463
    %v465 = vsub.f32 %v129, %v129
    %v466 = vand.u32 %v465, 4294901760
    %v467 = vsub.f32 %v465, %v466
    %v468 = vand.u32 %v467, 4294901760
    %469 = vmatprep.subr.mxu0 %v468
    %v470 = vsub.f32 %v128, %v128
    %v471 = vand.u32 %v470, 4294901760
    %v472 = vsub.f32 %v470, %v471
    %v473 = vand.u32 %v472, 4294901760
    %474 = vmatpush1.msra.mxu0 %v473
    %v475 = vsub.f32 %v131, %v131
    %v476 = vand.u32 %v475, 4294901760
    %v477 = vsub.f32 %v475, %v476
    %v478 = vand.u32 %v477, 4294901760
    %479 = vmatprep.subr.mxu0 %v478
    %v480 = vsub.f32 %v130, %v130
    %v481 = vand.u32 %v480, 4294901760
    %v482 = vsub.f32 %v480, %v481
    %v483 = vand.u32 %v482, 4294901760
    %484 = vmatpush1.msra.mxu0 %v483
    %v485 = vsub.f32 %v133, %v133
    %v486 = vand.u32 %v485, 4294901760
    %v487 = vsub.f32 %v485, %v486
    %v488 = vand.u32 %v487, 4294901760
    %489 = vmatprep.subr.mxu0 %v488
    %v490 = vsub.f32 %v132, %v132
    %v491 = vand.u32 %v490, 4294901760
    %v492 = vsub.f32 %v490, %v491
    %v493 = vand.u32 %v492, 4294901760
    %494 = vmatpush1.msra.mxu0 %v493
    %v495 = vsub.f32 %v135, %v135
    %v496 = vand.u32 %v495, 4294901760
    %v497 = vsub.f32 %v495, %v496
    %v498 = vand.u32 %v497, 4294901760
    %499 = vmatprep.subr.mxu0 %v498
    %v500 = vsub.f32 %v134, %v134
    %v501 = vand.u32 %v500, 4294901760
    %v502 = vsub.f32 %v500, %v501
    %v503 = vand.u32 %v502, 4294901760
    %504 = vmatpush1.msra.mxu0 %v503
    %v505 = vsub.f32 %v137, %v137
    %v506 = vand.u32 %v505, 4294901760
    %v507 = vsub.f32 %v505, %v506
    %v508 = vand.u32 %v507, 4294901760
    %509 = vmatprep.subr.mxu0 %v508
    %v510 = vsub.f32 %v136, %v136
    %v511 = vand.u32 %v510, 4294901760
    %v512 = vsub.f32 %v510, %v511
    %v513 = vand.u32 %v512, 4294901760
    %514 = vmatpush1.msra.mxu0 %v513
    %v515 = vsub.f32 %v139, %v139
    %v516 = vand.u32 %v515, 4294901760
    %v517 = vsub.f32 %v515, %v516
    %v518 = vand.u32 %v517, 4294901760
    %519 = vmatprep.subr.mxu0 %v518
    %v520 = vsub.f32 %v138, %v138
    %v521 = vand.u32 %v520, 4294901760
    %v522 = vsub.f32 %v520, %v521
    %v523 = vand.u32 %v522, 4294901760
    %524 = vmatpush1.msra.mxu0 %v523
    %v525 = vsub.f32 %v141, %v141
    %v526 = vand.u32 %v525, 4294901760
    %v527 = vsub.f32 %v525, %v526
    %v528 = vand.u32 %v527, 4294901760
    %529 = vmatprep.subr.mxu0 %v528
    %v530 = vsub.f32 %v140, %v140
    %v531 = vand.u32 %v530, 4294901760
    %v532 = vsub.f32 %v530, %v531
    %v533 = vand.u32 %v532, 4294901760
    %534 = vmatpush1.msra.mxu0 %v533
    %v535 = vsub.f32 %v143, %v143
    %v536 = vand.u32 %v535, 4294901760
    %v537 = vsub.f32 %v535, %v536
    %v538 = vand.u32 %v537, 4294901760
    %539 = vmatprep.subr.mxu0 %v538
    %v540 = vsub.f32 %v142, %v142
    %v541 = vand.u32 %v540, 4294901760
    %v542 = vsub.f32 %v540, %v541
    %v543 = vand.u32 %v542, 4294901760
    %544 = vmatpush1.msra.mxu0 %v543
    %v545 = vand.u32 %v47, 4294901760
    %546 = vmatprep.mubr.f32.mxu0 %v545
    %v547 = vand.u32 %v46, 4294901760
    %548 = vmatmul.mubr.f32.gmra.mrb[0].mxu0 %v547
    %v549 = vpop.f32.mrb[0].mxu0
    %v550 = vadd.f32 %v221, %v549
    %v551 = vpop.f32.mrb[0].mxu0
    %v552 = vadd.f32 %v223, %v551
    %553 = vdwg.mxu0
    %v554 = vsub.f32 %v81, %v81
    %555 = vmatprep.subr.mxu0 %v554
    %v556 = vsub.f32 %v80, %v80
    %557 = vmatpush1.msra.mxu0 %v556
    %v558 = vsub.f32 %v83, %v83
    %559 = vmatprep.subr.mxu0 %v558
    %v560 = vsub.f32 %v82, %v82
    %561 = vmatpush1.msra.mxu0 %v560
    %v562 = vsub.f32 %v85, %v85
    %563 = vmatprep.subr.mxu0 %v562
    %v564 = vsub.f32 %v84, %v84
    %565 = vmatpush1.msra.mxu0 %v564
    %v566 = vsub.f32 %v87, %v87
    %567 = vmatprep.subr.mxu0 %v566
    %v568 = vsub.f32 %v86, %v86
    %569 = vmatpush1.msra.mxu0 %v568
    %v570 = vsub.f32 %v89, %v89
    %571 = vmatprep.subr.mxu0 %v570
    %v572 = vsub.f32 %v88, %v88
    %573 = vmatpush1.msra.mxu0 %v572
    %v574 = vsub.f32 %v91, %v91
    %575 = vmatprep.subr.mxu0 %v574
    %v576 = vsub.f32 %v90, %v90
    %577 = vmatpush1.msra.mxu0 %v576
    %v578 = vsub.f32 %v93, %v93
    %579 = vmatprep.subr.mxu0 %v578
    %v580 = vsub.f32 %v92, %v92
    %581 = vmatpush1.msra.mxu0 %v580
    %v582 = vsub.f32 %v95, %v95
    %583 = vmatprep.subr.mxu0 %v582
    %v584 = vsub.f32 %v94, %v94
    %585 = vmatpush1.msra.mxu0 %v584
    %v586 = vsub.f32 %v97, %v97
    %587 = vmatprep.subr.mxu0 %v586
    %v588 = vsub.f32 %v96, %v96
    %589 = vmatpush1.msra.mxu0 %v588
    %v590 = vsub.f32 %v99, %v99
    %591 = vmatprep.subr.mxu0 %v590
    %v592 = vsub.f32 %v98, %v98
    %593 = vmatpush1.msra.mxu0 %v592
    %v594 = vsub.f32 %v101, %v101
    %595 = vmatprep.subr.mxu0 %v594
    %v596 = vsub.f32 %v100, %v100
    %597 = vmatpush1.msra.mxu0 %v596
    %v598 = vsub.f32 %v103, %v103
    %599 = vmatprep.subr.mxu0 %v598
    %v600 = vsub.f32 %v102, %v102
    %601 = vmatpush1.msra.mxu0 %v600
    %v602 = vsub.f32 %v105, %v105
    %603 = vmatprep.subr.mxu0 %v602
    %v604 = vsub.f32 %v104, %v104
    %605 = vmatpush1.msra.mxu0 %v604
    %v606 = vsub.f32 %v107, %v107
    %607 = vmatprep.subr.mxu0 %v606
    %v608 = vsub.f32 %v106, %v106
    %609 = vmatpush1.msra.mxu0 %v608
    %v610 = vsub.f32 %v109, %v109
    %611 = vmatprep.subr.mxu0 %v610
    %v612 = vsub.f32 %v108, %v108
    %613 = vmatpush1.msra.mxu0 %v612
    %v614 = vsub.f32 %v111, %v111
    %615 = vmatprep.subr.mxu0 %v614
    %v616 = vsub.f32 %v110, %v110
    %617 = vmatpush1.msra.mxu0 %v616
    %v618 = vsub.f32 %v113, %v113
    %619 = vmatprep.subr.mxu0 %v618
    %v620 = vsub.f32 %v112, %v112
    %621 = vmatpush1.msra.mxu0 %v620
    %v622 = vsub.f32 %v115, %v115
    %623 = vmatprep.subr.mxu0 %v622
    %v624 = vsub.f32 %v114, %v114
    %625 = vmatpush1.msra.mxu0 %v624
    %v626 = vsub.f32 %v117, %v117
    %627 = vmatprep.subr.mxu0 %v626
    %v628 = vsub.f32 %v116, %v116
    %629 = vmatpush1.msra.mxu0 %v628
    %v630 = vsub.f32 %v119, %v119
    %631 = vmatprep.subr.mxu0 %v630
    %v632 = vsub.f32 %v118, %v118
    %633 = vmatpush1.msra.mxu0 %v632
    %v634 = vsub.f32 %v121, %v121
    %635 = vmatprep.subr.mxu0 %v634
    %v636 = vsub.f32 %v120, %v120
    %637 = vmatpush1.msra.mxu0 %v636
    %v638 = vsub.f32 %v123, %v123
    %639 = vmatprep.subr.mxu0 %v638
    %v640 = vsub.f32 %v122, %v122
    %641 = vmatpush1.msra.mxu0 %v640
    %v642 = vsub.f32 %v125, %v125
    %643 = vmatprep.subr.mxu0 %v642
    %v644 = vsub.f32 %v124, %v124
    %645 = vmatpush1.msra.mxu0 %v644
    %v646 = vsub.f32 %v127, %v127
    %647 = vmatprep.subr.mxu0 %v646
    %v648 = vsub.f32 %v126, %v126
    %649 = vmatpush1.msra.mxu0 %v648
    %v650 = vsub.f32 %v129, %v129
    %651 = vmatprep.subr.mxu0 %v650
    %v652 = vsub.f32 %v128, %v128
    %653 = vmatpush1.msra.mxu0 %v652
    %v654 = vsub.f32 %v131, %v131
    %655 = vmatprep.subr.mxu0 %v654
    %v656 = vsub.f32 %v130, %v130
    %657 = vmatpush1.msra.mxu0 %v656
    %v658 = vsub.f32 %v133, %v133
    %659 = vmatprep.subr.mxu0 %v658
    %v660 = vsub.f32 %v132, %v132
    %661 = vmatpush1.msra.mxu0 %v660
    %v662 = vsub.f32 %v135, %v135
    %663 = vmatprep.subr.mxu0 %v662
    %v664 = vsub.f32 %v134, %v134
    %665 = vmatpush1.msra.mxu0 %v664
    %v666 = vsub.f32 %v137, %v137
    %667 = vmatprep.subr.mxu0 %v666
    %v668 = vsub.f32 %v136, %v136
    %669 = vmatpush1.msra.mxu0 %v668
    %v670 = vsub.f32 %v139, %v139
    %671 = vmatprep.subr.mxu0 %v670
    %v672 = vsub.f32 %v138, %v138
    %673 = vmatpush1.msra.mxu0 %v672
    %v674 = vsub.f32 %v141, %v141
    %675 = vmatprep.subr.mxu0 %v674
    %v676 = vsub.f32 %v140, %v140
    %677 = vmatpush1.msra.mxu0 %v676
    %v678 = vsub.f32 %v143, %v143
    %679 = vmatprep.subr.mxu0 %v678
    %v680 = vsub.f32 %v142, %v142
    %681 = vmatpush1.msra.mxu0 %v680
    %v682 = vand.u32 %v47, 4294901760
    %v683 = vsub.f32 %v47, %v682
    %684 = vmatprep.mubr.f32.mxu0 %v683
    %v685 = vand.u32 %v46, 4294901760
    %v686 = vsub.f32 %v46, %v685
    %687 = vmatmul.mubr.f32.gmra.mrb[0].mxu0 %v686
    %v688 = vpop.f32.mrb[0].mxu0
    %v689 = vadd.f32 %v550, %v688
    %v690 = vpop.f32.mrb[0].mxu0
    %v691 = vadd.f32 %v552, %v690
    %692 = vdwg.mxu0
    %693 = vmatprep.subr.mxu0 %v81
    %694 = vmatpush1.msra.mxu0 %v80
    %695 = vmatprep.subr.mxu0 %v83
    %696 = vmatpush1.msra.mxu0 %v82
    %697 = vmatprep.subr.mxu0 %v85
    %698 = vmatpush1.msra.mxu0 %v84
    %699 = vmatprep.subr.mxu0 %v87
    %700 = vmatpush1.msra.mxu0 %v86
    %701 = vmatprep.subr.mxu0 %v89
    %702 = vmatpush1.msra.mxu0 %v88
    %703 = vmatprep.subr.mxu0 %v91
    %704 = vmatpush1.msra.mxu0 %v90
    %705 = vmatprep.subr.mxu0 %v93
    %706 = vmatpush1.msra.mxu0 %v92
    %707 = vmatprep.subr.mxu0 %v95
    %708 = vmatpush1.msra.mxu0 %v94
    %709 = vmatprep.subr.mxu0 %v97
    %710 = vmatpush1.msra.mxu0 %v96
    %711 = vmatprep.subr.mxu0 %v99
    %712 = vmatpush1.msra.mxu0 %v98
    %713 = vmatprep.subr.mxu0 %v101
    %714 = vmatpush1.msra.mxu0 %v100
    %715 = vmatprep.subr.mxu0 %v103
    %716 = vmatpush1.msra.mxu0 %v102
    %717 = vmatprep.subr.mxu0 %v105
    %718 = vmatpush1.msra.mxu0 %v104
    %719 = vmatprep.subr.mxu0 %v107
    %720 = vmatpush1.msra.mxu0 %v106
    %721 = vmatprep.subr.mxu0 %v109
    %722 = vmatpush1.msra.mxu0 %v108
    %723 = vmatprep.subr.mxu0 %v111
    %724 = vmatpush1.msra.mxu0 %v110
    %725 = vmatprep.subr.mxu0 %v113
    %726 = vmatpush1.msra.mxu0 %v112
    %727 = vmatprep.subr.mxu0 %v115
    %728 = vmatpush1.msra.mxu0 %v114
    %729 = vmatprep.subr.mxu0 %v117
    %730 = vmatpush1.msra.mxu0 %v116
    %731 = vmatprep.subr.mxu0 %v119
    %732 = vmatpush1.msra.mxu0 %v118
    %733 = vmatprep.subr.mxu0 %v121
    %734 = vmatpush1.msra.mxu0 %v120
    %735 = vmatprep.subr.mxu0 %v123
    %736 = vmatpush1.msra.mxu0 %v122
    %737 = vmatprep.subr.mxu0 %v125
    %738 = vmatpush1.msra.mxu0 %v124
    %739 = vmatprep.subr.mxu0 %v127
    %740 = vmatpush1.msra.mxu0 %v126
    %741 = vmatprep.subr.mxu0 %v129
    %742 = vmatpush1.msra.mxu0 %v128
    %743 = vmatprep.subr.mxu0 %v131
    %744 = vmatpush1.msra.mxu0 %v130
    %745 = vmatprep.subr.mxu0 %v133
    %746 = vmatpush1.msra.mxu0 %v132
    %747 = vmatprep.subr.mxu0 %v135
    %748 = vmatpush1.msra.mxu0 %v134
    %749 = vmatprep.subr.mxu0 %v137
    %750 = vmatpush1.msra.mxu0 %v136
    %751 = vmatprep.subr.mxu0 %v139
    %752 = vmatpush1.msra.mxu0 %v138
    %753 = vmatprep.subr.mxu0 %v141
    %754 = vmatpush1.msra.mxu0 %v140
    %755 = vmatprep.subr.mxu0 %v143
    %756 = vmatpush1.msra.mxu0 %v142
    %v757 = vand.u32 %v47, 4294901760
    %v758 = vsub.f32 %v47, %v757
    %v759 = vand.u32 %v758, 4294901760
    %760 = vmatprep.mubr.f32.mxu0 %v759
    %v761 = vand.u32 %v46, 4294901760
    %v762 = vsub.f32 %v46, %v761
    %v763 = vand.u32 %v762, 4294901760
    %764 = vmatmul.mubr.f32.gmra.mrb[0].mxu0 %v763
    %v765 = vpop.f32.mrb[0].mxu0
    %v766 = vadd.f32 %v689, %v765
    %v767 = vpop.f32.mrb[0].mxu0
    %v768 = vadd.f32 %v691, %v767
    %769 = vdwg.mxu0
    %v770 = vsub.f32 %v81, %v81
    %v771 = vand.u32 %v770, 4294901760
    %772 = vmatprep.subr.mxu0 %v771
    %v773 = vsub.f32 %v80, %v80
    %v774 = vand.u32 %v773, 4294901760
    %775 = vmatpush1.msra.mxu0 %v774
    %v776 = vsub.f32 %v83, %v83
    %v777 = vand.u32 %v776, 4294901760
    %778 = vmatprep.subr.mxu0 %v777
    %v779 = vsub.f32 %v82, %v82
    %v780 = vand.u32 %v779, 4294901760
    %781 = vmatpush1.msra.mxu0 %v780
    %v782 = vsub.f32 %v85, %v85
    %v783 = vand.u32 %v782, 4294901760
    %784 = vmatprep.subr.mxu0 %v783
    %v785 = vsub.f32 %v84, %v84
    %v786 = vand.u32 %v785, 4294901760
    %787 = vmatpush1.msra.mxu0 %v786
    %v788 = vsub.f32 %v87, %v87
    %v789 = vand.u32 %v788, 4294901760
    %790 = vmatprep.subr.mxu0 %v789
    %v791 = vsub.f32 %v86, %v86
    %v792 = vand.u32 %v791, 4294901760
    %793 = vmatpush1.msra.mxu0 %v792
    %v794 = vsub.f32 %v89, %v89
    %v795 = vand.u32 %v794, 4294901760
    %796 = vmatprep.subr.mxu0 %v795
    %v797 = vsub.f32 %v88, %v88
    %v798 = vand.u32 %v797, 4294901760
    %799 = vmatpush1.msra.mxu0 %v798
    %v800 = vsub.f32 %v91, %v91
    %v801 = vand.u32 %v800, 4294901760
    %802 = vmatprep.subr.mxu0 %v801
    %v803 = vsub.f32 %v90, %v90
    %v804 = vand.u32 %v803, 4294901760
    %805 = vmatpush1.msra.mxu0 %v804
    %v806 = vsub.f32 %v93, %v93
    %v807 = vand.u32 %v806, 4294901760
    %808 = vmatprep.subr.mxu0 %v807
    %v809 = vsub.f32 %v92, %v92
    %v810 = vand.u32 %v809, 4294901760
    %811 = vmatpush1.msra.mxu0 %v810
    %v812 = vsub.f32 %v95, %v95
    %v813 = vand.u32 %v812, 4294901760
    %814 = vmatprep.subr.mxu0 %v813
    %v815 = vsub.f32 %v94, %v94
    %v816 = vand.u32 %v815, 4294901760
    %817 = vmatpush1.msra.mxu0 %v816
    %v818 = vsub.f32 %v97, %v97
    %v819 = vand.u32 %v818, 4294901760
    %820 = vmatprep.subr.mxu0 %v819
    %v821 = vsub.f32 %v96, %v96
    %v822 = vand.u32 %v821, 4294901760
    %823 = vmatpush1.msra.mxu0 %v822
    %v824 = vsub.f32 %v99, %v99
    %v825 = vand.u32 %v824, 4294901760
    %826 = vmatprep.subr.mxu0 %v825
    %v827 = vsub.f32 %v98, %v98
    %v828 = vand.u32 %v827, 4294901760
    %829 = vmatpush1.msra.mxu0 %v828
    %v830 = vsub.f32 %v101, %v101
    %v831 = vand.u32 %v830, 4294901760
    %832 = vmatprep.subr.mxu0 %v831
    %v833 = vsub.f32 %v100, %v100
    %v834 = vand.u32 %v833, 4294901760
    %835 = vmatpush1.msra.mxu0 %v834
    %v836 = vsub.f32 %v103, %v103
    %v837 = vand.u32 %v836, 4294901760
    %838 = vmatprep.subr.mxu0 %v837
    %v839 = vsub.f32 %v102, %v102
    %v840 = vand.u32 %v839, 4294901760
    %841 = vmatpush1.msra.mxu0 %v840
    %v842 = vsub.f32 %v105, %v105
    %v843 = vand.u32 %v842, 4294901760
    %844 = vmatprep.subr.mxu0 %v843
    %v845 = vsub.f32 %v104, %v104
    %v846 = vand.u32 %v845, 4294901760
    %847 = vmatpush1.msra.mxu0 %v846
    %v848 = vsub.f32 %v107, %v107
    %v849 = vand.u32 %v848, 4294901760
    %850 = vmatprep.subr.mxu0 %v849
    %v851 = vsub.f32 %v106, %v106
    %v852 = vand.u32 %v851, 4294901760
    %853 = vmatpush1.msra.mxu0 %v852
    %v854 = vsub.f32 %v109, %v109
    %v855 = vand.u32 %v854, 4294901760
    %856 = vmatprep.subr.mxu0 %v855
    %v857 = vsub.f32 %v108, %v108
    %v858 = vand.u32 %v857, 4294901760
    %859 = vmatpush1.msra.mxu0 %v858
    %v860 = vsub.f32 %v111, %v111
    %v861 = vand.u32 %v860, 4294901760
    %862 = vmatprep.subr.mxu0 %v861
    %v863 = vsub.f32 %v110, %v110
    %v864 = vand.u32 %v863, 4294901760
    %865 = vmatpush1.msra.mxu0 %v864
    %v866 = vsub.f32 %v113, %v113
    %v867 = vand.u32 %v866, 4294901760
    %868 = vmatprep.subr.mxu0 %v867
    %v869 = vsub.f32 %v112, %v112
    %v870 = vand.u32 %v869, 4294901760
    %871 = vmatpush1.msra.mxu0 %v870
    %v872 = vsub.f32 %v115, %v115
    %v873 = vand.u32 %v872, 4294901760
    %874 = vmatprep.subr.mxu0 %v873
    %v875 = vsub.f32 %v114, %v114
    %v876 = vand.u32 %v875, 4294901760
    %877 = vmatpush1.msra.mxu0 %v876
    %v878 = vsub.f32 %v117, %v117
    %v879 = vand.u32 %v878, 4294901760
    %880 = vmatprep.subr.mxu0 %v879
    %v881 = vsub.f32 %v116, %v116
    %v882 = vand.u32 %v881, 4294901760
    %883 = vmatpush1.msra.mxu0 %v882
    %v884 = vsub.f32 %v119, %v119
    %v885 = vand.u32 %v884, 4294901760
    %886 = vmatprep.subr.mxu0 %v885
    %v887 = vsub.f32 %v118, %v118
    %v888 = vand.u32 %v887, 4294901760
    %889 = vmatpush1.msra.mxu0 %v888
    %v890 = vsub.f32 %v121, %v121
    %v891 = vand.u32 %v890, 4294901760
    %892 = vmatprep.subr.mxu0 %v891
    %v893 = vsub.f32 %v120, %v120
    %v894 = vand.u32 %v893, 4294901760
    %895 = vmatpush1.msra.mxu0 %v894
    %v896 = vsub.f32 %v123, %v123
    %v897 = vand.u32 %v896, 4294901760
    %898 = vmatprep.subr.mxu0 %v897
    %v899 = vsub.f32 %v122, %v122
    %v900 = vand.u32 %v899, 4294901760
    %901 = vmatpush1.msra.mxu0 %v900
    %v902 = vsub.f32 %v125, %v125
    %v903 = vand.u32 %v902, 4294901760
    %904 = vmatprep.subr.mxu0 %v903
    %v905 = vsub.f32 %v124, %v124
    %v906 = vand.u32 %v905, 4294901760
    %907 = vmatpush1.msra.mxu0 %v906
    %v908 = vsub.f32 %v127, %v127
    %v909 = vand.u32 %v908, 4294901760
    %910 = vmatprep.subr.mxu0 %v909
    %v911 = vsub.f32 %v126, %v126
    %v912 = vand.u32 %v911, 4294901760
    %913 = vmatpush1.msra.mxu0 %v912
    %v914 = vsub.f32 %v129, %v129
    %v915 = vand.u32 %v914, 4294901760
    %916 = vmatprep.subr.mxu0 %v915
    %v917 = vsub.f32 %v128, %v128
    %v918 = vand.u32 %v917, 4294901760
    %919 = vmatpush1.msra.mxu0 %v918
    %v920 = vsub.f32 %v131, %v131
    %v921 = vand.u32 %v920, 4294901760
    %922 = vmatprep.subr.mxu0 %v921
    %v923 = vsub.f32 %v130, %v130
    %v924 = vand.u32 %v923, 4294901760
    %925 = vmatpush1.msra.mxu0 %v924
    %v926 = vsub.f32 %v133, %v133
    %v927 = vand.u32 %v926, 4294901760
    %928 = vmatprep.subr.mxu0 %v927
    %v929 = vsub.f32 %v132, %v132
    %v930 = vand.u32 %v929, 4294901760
    %931 = vmatpush1.msra.mxu0 %v930
    %v932 = vsub.f32 %v135, %v135
    %v933 = vand.u32 %v932, 4294901760
    %934 = vmatprep.subr.mxu0 %v933
    %v935 = vsub.f32 %v134, %v134
    %v936 = vand.u32 %v935, 4294901760
    %937 = vmatpush1.msra.mxu0 %v936
    %v938 = vsub.f32 %v137, %v137
    %v939 = vand.u32 %v938, 4294901760
    %940 = vmatprep.subr.mxu0 %v939
    %v941 = vsub.f32 %v136, %v136
    %v942 = vand.u32 %v941, 4294901760
    %943 = vmatpush1.msra.mxu0 %v942
    %v944 = vsub.f32 %v139, %v139
    %v945 = vand.u32 %v944, 4294901760
    %946 = vmatprep.subr.mxu0 %v945
    %v947 = vsub.f32 %v138, %v138
    %v948 = vand.u32 %v947, 4294901760
    %949 = vmatpush1.msra.mxu0 %v948
    %v950 = vsub.f32 %v141, %v141
    %v951 = vand.u32 %v950, 4294901760
    %952 = vmatprep.subr.mxu0 %v951
    %v953 = vsub.f32 %v140, %v140
    %v954 = vand.u32 %v953, 4294901760
    %955 = vmatpush1.msra.mxu0 %v954
    %v956 = vsub.f32 %v143, %v143
    %v957 = vand.u32 %v956, 4294901760
    %958 = vmatprep.subr.mxu0 %v957
    %v959 = vsub.f32 %v142, %v142
    %v960 = vand.u32 %v959, 4294901760
    %961 = vmatpush1.msra.mxu0 %v960
    %v962 = vand.u32 %v47, 4294901760
    %963 = vmatprep.mubr.f32.mxu0 %v962
    %v964 = vand.u32 %v46, 4294901760
    %965 = vmatmul.mubr.f32.gmra.mrb[0].mxu0 %v964
    %v966 = vpop.f32.mrb[0].mxu0
    %v967 = vadd.f32 %v766, %v966
    %v968 = vpop.f32.mrb[0].mxu0
    %v969 = vadd.f32 %v768, %v968
    %970 = vdwg.mxu0
    %971 = vmatprep.subr.mxu0 %v81
    %972 = vmatpush1.msra.mxu0 %v80
    %973 = vmatprep.subr.mxu0 %v83
    %974 = vmatpush1.msra.mxu0 %v82
    %975 = vmatprep.subr.mxu0 %v85
    %976 = vmatpush1.msra.mxu0 %v84
    %977 = vmatprep.subr.mxu0 %v87
    %978 = vmatpush1.msra.mxu0 %v86
    %979 = vmatprep.subr.mxu0 %v89
    %980 = vmatpush1.msra.mxu0 %v88
    %981 = vmatprep.subr.mxu0 %v91
    %982 = vmatpush1.msra.mxu0 %v90
    %983 = vmatprep.subr.mxu0 %v93
    %984 = vmatpush1.msra.mxu0 %v92
    %985 = vmatprep.subr.mxu0 %v95
    %986 = vmatpush1.msra.mxu0 %v94
    %987 = vmatprep.subr.mxu0 %v97
    %988 = vmatpush1.msra.mxu0 %v96
    %989 = vmatprep.subr.mxu0 %v99
    %990 = vmatpush1.msra.mxu0 %v98
    %991 = vmatprep.subr.mxu0 %v101
    %992 = vmatpush1.msra.mxu0 %v100
    %993 = vmatprep.subr.mxu0 %v103
    %994 = vmatpush1.msra.mxu0 %v102
    %995 = vmatprep.subr.mxu0 %v105
    %996 = vmatpush1.msra.mxu0 %v104
    %997 = vmatprep.subr.mxu0 %v107
    %998 = vmatpush1.msra.mxu0 %v106
    %999 = vmatprep.subr.mxu0 %v109
    %1000 = vmatpush1.msra.mxu0 %v108
    %1001 = vmatprep.subr.mxu0 %v111
    %1002 = vmatpush1.msra.mxu0 %v110
    %1003 = vmatprep.subr.mxu0 %v113
    %1004 = vmatpush1.msra.mxu0 %v112
    %1005 = vmatprep.subr.mxu0 %v115
    %1006 = vmatpush1.msra.mxu0 %v114
    %1007 = vmatprep.subr.mxu0 %v117
    %1008 = vmatpush1.msra.mxu0 %v116
    %1009 = vmatprep.subr.mxu0 %v119
    %1010 = vmatpush1.msra.mxu0 %v118
    %1011 = vmatprep.subr.mxu0 %v121
    %1012 = vmatpush1.msra.mxu0 %v120
    %1013 = vmatprep.subr.mxu0 %v123
    %1014 = vmatpush1.msra.mxu0 %v122
    %1015 = vmatprep.subr.mxu0 %v125
    %1016 = vmatpush1.msra.mxu0 %v124
    %1017 = vmatprep.subr.mxu0 %v127
    %1018 = vmatpush1.msra.mxu0 %v126
    %1019 = vmatprep.subr.mxu0 %v129
    %1020 = vmatpush1.msra.mxu0 %v128
    %1021 = vmatprep.subr.mxu0 %v131
    %1022 = vmatpush1.msra.mxu0 %v130
    %1023 = vmatprep.subr.mxu0 %v133
    %1024 = vmatpush1.msra.mxu0 %v132
    %1025 = vmatprep.subr.mxu0 %v135
    %1026 = vmatpush1.msra.mxu0 %v134
    %1027 = vmatprep.subr.mxu0 %v137
    %1028 = vmatpush1.msra.mxu0 %v136
    %1029 = vmatprep.subr.mxu0 %v139
    %1030 = vmatpush1.msra.mxu0 %v138
    %1031 = vmatprep.subr.mxu0 %v141
    %1032 = vmatpush1.msra.mxu0 %v140
    %1033 = vmatprep.subr.mxu0 %v143
    %1034 = vmatpush1.msra.mxu0 %v142
    %v1035 = vand.u32 %v47, 4294901760
    %1036 = vmatprep.mubr.f32.mxu0 %v1035
    %v1037 = vand.u32 %v46, 4294901760
    %1038 = vmatmul.mubr.f32.gmra.mrb[0].mxu0 %v1037
    %v1039 = vpop.f32.mrb[0].mxu0
    %v1040 = vadd.f32 %v967, %v1039
    %v1041 = vpop.f32.mrb[0].mxu0
    %v1042 = vadd.f32 %v969, %v1041
    %1043 = vdwg.mxu0
    %1044 = vst [vmem:[#allocation9] sm:$0xff] %v1040
    %1045 = vst [vmem:[#allocation9 + $0x8] sm:$0xff] %v1042
    // Predicated region
    $region18: #{tpu_custom_call.1} parent=1 // pred_check
      _
    $region19: #{tpu_custom_call.1} parent=1 // pred_check_branch
      %1047 = sbr.rel (0) target = $region21
    $region20: #{tpu_custom_call.1} parent=1 // pred_region
      %s1049 = ssub.s32 256, 256
      %1050 = vsyncadd [#allocation6], %s1049
      %s1052 = sshll.u32 [#allocation9], 4
      %s1053 = int_to_ptr.vmem [resolvable:$true] %s1052
      %1055 = dma.vmem_to_hbm [thread:$0]  %s1053, 256, %s3, [#allocation6]
    $region21: #{tpu_custom_call.1} parent=1 // pred_fallthru
      _
    // Predicated region
    $region22: #{tpu_custom_call.1} parent=1 // pred_check
      _
    $region23: #{tpu_custom_call.1} parent=1 // pred_check_branch
      %1057 = sbr.rel (0) target = $region25
    $region24: #{tpu_custom_call.1} parent=1 // pred_region
      %1058 = dma.done [#allocation6], 256
    $region25: #{tpu_custom_call.1} parent=1 // pred_fallthru
      _
    %1059 = vsyncpa [#allocation5], 1
    %1060 = vsyncpa [#allocation8], 1
    %1061 = vsyncpa [#allocation6], 1

</llo_original>
